<compile_context>
chip_gen: v7x
topology: tpu7x:2x2x1
jax: 0.10.0
libtpu: 0.0.40
codegen_flags: <defaults>
</compile_context>

<pallas_src>
import functools

import jax
import jax.numpy as jnp
from jax import lax
from jax.experimental import pallas as pl
from jax.experimental.pallas import tpu as pltpu


def _masked_l1_kernel(pred_ref, target_ref, mask_ref, out_ref,
                      loss_acc, mask_acc, *, n_valid, needs_tail_mask):
    """Grid axis 0 walks row tiles; VMEM vector accumulators carried across steps."""
    i = pl.program_id(0)
    last = pl.num_programs(0) - 1

    @pl.when(i == 0)
    def _init():
        loss_acc[...] = jnp.zeros_like(loss_acc)
        mask_acc[...] = jnp.zeros_like(mask_acc)

    def accumulate(apply_tail_mask):
        # Native-dtype loads, cast to f32 on the VPU (free vs. HBM bandwidth).
        p = pred_ref[...].astype(jnp.float32)
        t = target_ref[...].astype(jnp.float32)
        m = mask_ref[...].astype(jnp.float32)
        contrib = jnp.abs(p - t) * m
        if apply_tail_mask:
            br, bl = pred_ref.shape  # block shape (tile_rows_eff, 128)
            row_ids = lax.broadcasted_iota(jnp.int32, (br, bl), 0)
            lane_ids = lax.broadcasted_iota(jnp.int32, (br, bl), 1)
            gidx = (i * br + row_ids) * bl + lane_ids
            valid = gidx < n_valid
            contrib = jnp.where(valid, contrib, 0.0)
            m = jnp.where(valid, m, 0.0)
        # Pure elementwise VPU adds in the hot loop; no per-step XLU reduce.
        loss_acc[...] += contrib
        mask_acc[...] += m

    if needs_tail_mask:
        @pl.when(i < last)
        def _body():
            accumulate(False)

        @pl.when(i == last)
        def _tail():
            accumulate(True)
    else:
        accumulate(False)

    @pl.when(i == last)
    def _finalize():
        # One cross-lane reduce + divide in the epilogue only.
        loss_sum = jnp.sum(loss_acc[...])
        mask_sum = jnp.sum(mask_acc[...])
        out_ref[0, 0] = loss_sum / (mask_sum + jnp.float32(1e-5))


def masked_l1_loss(pred, target, loss_mask, *, tile_rows=1024, lanes=128):
    assert pred.shape == target.shape == loss_mask.shape, (
        "mask must match pred/target shape (PyTorch sum(mask) semantics)")
    assert tile_rows % 8 == 0 and tile_rows >= 8

    n = pred.size
    n_pad = (-(-n // lanes)) * lanes  # pad only up to the next lane multiple

    def prep(x):
        x = jnp.ravel(x)                      # free reshape for contiguous inputs
        if n_pad != n:
            x = jnp.pad(x, (0, n_pad - n))    # only the lane-misaligned case copies
        return x.reshape(n_pad // lanes, lanes)

    p2, t2, m2 = prep(pred), prep(target), prep(loss_mask)
    rows = n_pad // lanes

    if rows <= tile_rows:
        tile_rows_eff = rows                  # full-extent block, single grid step
        needs_tail_mask = False
    else:
        tile_rows_eff = tile_rows
        needs_tail_mask = (rows % tile_rows != 0)

    grid = (pl.cdiv(rows, tile_rows_eff),)
    tile_spec = pl.BlockSpec((tile_rows_eff, lanes), lambda i: (i, 0))

    bytes_accessed = int(p2.size * p2.dtype.itemsize
                         + t2.size * t2.dtype.itemsize
                         + m2.size * m2.dtype.itemsize + 4)

    kernel = functools.partial(_masked_l1_kernel, n_valid=n,
                               needs_tail_mask=needs_tail_mask)

    # TODO(synk): on v7x, shard the row range over the 2 TensorCores with a
    # leading "parallel" axis and per-core partial outputs (single-TC here).
    out = pl.pallas_call(
        kernel,
        out_shape=jax.ShapeDtypeStruct((1, 1), jnp.float32),
        grid_spec=pltpu.PrefetchScalarGridSpec(
            num_scalar_prefetch=0,
            grid=grid,
            in_specs=[tile_spec, tile_spec, tile_spec],
            out_specs=pl.BlockSpec((1, 1), lambda i: (0, 0),
                                   memory_space=pltpu.SMEM),
            scratch_shapes=[pltpu.VMEM((tile_rows_eff, lanes), jnp.float32),
                            pltpu.VMEM((tile_rows_eff, lanes), jnp.float32)],
        ),
        compiler_params=pltpu.CompilerParams(
            dimension_semantics=("arbitrary",)),
        cost_estimate=pl.CostEstimate(flops=4 * n, transcendentals=0,
                                      bytes_accessed=bytes_accessed),
    )(p2, t2, m2)

    loss = out[0, 0]
    return loss, {"loss": loss}


if __name__ == "__main__":
    key = jax.random.PRNGKey(0)
    k_pred, k_tgt, k_mask = jax.random.split(key, 3)

    # NCHW inputs, small shapes (aligned fast path: no pad, no tail mask).
    shape = (2, 4, 16, 16)
    pred = jax.random.normal(k_pred, shape, dtype=jnp.float32)
    target = jax.random.normal(k_tgt, shape, dtype=jnp.float32)
    loss_mask = jax.random.bernoulli(k_mask, p=0.5, shape=shape).astype(jnp.float32)

    loss, aux = masked_l1_loss(pred, target, loss_mask)
    loss = jax.block_until_ready(loss)

    ref = jnp.sum(jnp.abs(pred - target) * loss_mask) / (jnp.sum(loss_mask) + 1e-5)
    assert jnp.allclose(loss, ref, rtol=1e-5, atol=1e-6), (float(loss), float(ref))

    # Exercise the lane-pad + trailing-partial-block (tail mask) path at tiny size.
    shape2 = (3, 5, 7, 11)  # 1155 elements
    pred2 = jax.random.normal(k_pred, shape2, dtype=jnp.float32)
    target2 = jax.random.normal(k_tgt, shape2, dtype=jnp.float32)
    mask2 = jax.random.bernoulli(k_mask, p=0.5, shape=shape2).astype(jnp.float32)
    loss2, _ = masked_l1_loss(pred2, target2, mask2, tile_rows=8)
    loss2 = jax.block_until_ready(loss2)
    ref2 = jnp.sum(jnp.abs(pred2 - target2) * mask2) / (jnp.sum(mask2) + 1e-5)
    assert jnp.allclose(loss2, ref2, rtol=1e-5, atol=1e-6), (float(loss2), float(ref2))

    print("KERNEL_OK")
</pallas_src>

<mosaic_0001>
module attributes {stable_mosaic.version = 11 : i64} {
  func.func @_masked_l1_kernel(%arg0: i32, %arg1: memref<16x128xf32, #tpu.memory_space<vmem>>, %arg2: memref<16x128xf32, #tpu.memory_space<vmem>>, %arg3: memref<16x128xf32, #tpu.memory_space<vmem>>, %arg4: memref<1x1xf32, #tpu.memory_space<smem>>, %arg5: memref<16x128xf32, #tpu.memory_space<vmem>>, %arg6: memref<16x128xf32, #tpu.memory_space<vmem>>) attributes {dimension_semantics = [#tpu.dimension_semantics<arbitrary>], iteration_bounds = array<i64: 1>, scalar_prefetch = 0 : i64, scratch_operands = 2 : i64, tpu.core_type = #tpu.core_type<tc>, window_params = [{transform_indices = @transform_0, window_bounds = array<i64: 16, 128>}, {transform_indices = @transform_1, window_bounds = array<i64: 16, 128>}, {transform_indices = @transform_2, window_bounds = array<i64: 16, 128>}, {transform_indices = @transform_3, window_bounds = array<i64: 1, 1>}]} {
    %c0_i32 = arith.constant 0 : i32
    %0 = arith.cmpi eq, %arg0, %c0_i32 : i32
    %1 = arith.extui %0 : i1 to i32
    %c0_i32_0 = arith.constant 0 : i32
    %2 = arith.cmpi ne, %1, %c0_i32_0 : i32
    scf.if %2 {
      %cst = arith.constant 0.000000e+00 : f32
      %18 = vector.broadcast %cst : f32 to vector<16x128xf32>
      %c0_16 = arith.constant 0 : index
      %c0_17 = arith.constant 0 : index
      %19 = vector.load %arg5[%c0_16, %c0_17] : memref<16x128xf32, #tpu.memory_space<vmem>>, vector<16x128xf32>
      tpu.vector_store %arg5[%c0_16, %c0_17], %18 {strides = array<i32>} : memref<16x128xf32, #tpu.memory_space<vmem>>, vector<16x128xf32>,
      %cst_18 = arith.constant 0.000000e+00 : f32
      %20 = vector.broadcast %cst_18 : f32 to vector<16x128xf32>
      %c0_19 = arith.constant 0 : index
      %c0_20 = arith.constant 0 : index
      %21 = vector.load %arg6[%c0_19, %c0_20] : memref<16x128xf32, #tpu.memory_space<vmem>>, vector<16x128xf32>
      tpu.vector_store %arg6[%c0_19, %c0_20], %20 {strides = array<i32>} : memref<16x128xf32, #tpu.memory_space<vmem>>, vector<16x128xf32>,
    } else {
    }
    %c0 = arith.constant 0 : index
    %c0_1 = arith.constant 0 : index
    %3 = vector.load %arg1[%c0, %c0_1] : memref<16x128xf32, #tpu.memory_space<vmem>>, vector<16x128xf32>
    %c0_2 = arith.constant 0 : index
    %c0_3 = arith.constant 0 : index
    %4 = vector.load %arg2[%c0_2, %c0_3] : memref<16x128xf32, #tpu.memory_space<vmem>>, vector<16x128xf32>
    %c0_4 = arith.constant 0 : index
    %c0_5 = arith.constant 0 : index
    %5 = vector.load %arg3[%c0_4, %c0_5] : memref<16x128xf32, #tpu.memory_space<vmem>>, vector<16x128xf32>
    %6 = arith.subf %3, %4 : vector<16x128xf32>
    %7 = math.absf %6 : vector<16x128xf32>
    %8 = arith.mulf %7, %5 : vector<16x128xf32>
    %c0_6 = arith.constant 0 : index
    %c0_7 = arith.constant 0 : index
    %9 = vector.load %arg5[%c0_6, %c0_7] : memref<16x128xf32, #tpu.memory_space<vmem>>, vector<16x128xf32>
    %10 = arith.addf %9, %8 : vector<16x128xf32>
    %c0_8 = arith.constant 0 : index
    %c0_9 = arith.constant 0 : index
    %11 = vector.load %arg5[%c0_8, %c0_9] : memref<16x128xf32, #tpu.memory_space<vmem>>, vector<16x128xf32>
    tpu.vector_store %arg5[%c0_8, %c0_9], %10 {strides = array<i32>} : memref<16x128xf32, #tpu.memory_space<vmem>>, vector<16x128xf32>,
    %c0_10 = arith.constant 0 : index
    %c0_11 = arith.constant 0 : index
    %12 = vector.load %arg6[%c0_10, %c0_11] : memref<16x128xf32, #tpu.memory_space<vmem>>, vector<16x128xf32>
    %13 = arith.addf %12, %5 : vector<16x128xf32>
    %c0_12 = arith.constant 0 : index
    %c0_13 = arith.constant 0 : index
    %14 = vector.load %arg6[%c0_12, %c0_13] : memref<16x128xf32, #tpu.memory_space<vmem>>, vector<16x128xf32>
    tpu.vector_store %arg6[%c0_12, %c0_13], %13 {strides = array<i32>} : memref<16x128xf32, #tpu.memory_space<vmem>>, vector<16x128xf32>,
    %c0_i32_14 = arith.constant 0 : i32
    %15 = arith.cmpi eq, %arg0, %c0_i32_14 : i32
    %16 = arith.extui %15 : i1 to i32
    %c0_i32_15 = arith.constant 0 : i32
    %17 = arith.cmpi ne, %16, %c0_i32_15 : i32
    scf.if %17 {
      %c0_16 = arith.constant 0 : index
      %c0_17 = arith.constant 0 : index
      %18 = vector.load %arg5[%c0_16, %c0_17] : memref<16x128xf32, #tpu.memory_space<vmem>>, vector<16x128xf32>
      %19 = vector.shape_cast %18 : vector<16x128xf32> to vector<1x16x128xf32>
      %cst = arith.constant dense<0.000000e+00> : vector<1xf32>
      %20 = vector.multi_reduction <add>, %19, %cst [1, 2] : vector<1x16x128xf32> to vector<1xf32>
      %21 = vector.shape_cast %20 : vector<1xf32> to vector<1x1x1xf32>
      %22 = vector.extract %21[0, 0, 0] : f32 from vector<1x1x1xf32>
      %c0_18 = arith.constant 0 : index
      %c0_19 = arith.constant 0 : index
      %23 = vector.load %arg6[%c0_18, %c0_19] : memref<16x128xf32, #tpu.memory_space<vmem>>, vector<16x128xf32>
      %24 = vector.shape_cast %23 : vector<16x128xf32> to vector<1x16x128xf32>
      %cst_20 = arith.constant dense<0.000000e+00> : vector<1xf32>
      %25 = vector.multi_reduction <add>, %24, %cst_20 [1, 2] : vector<1x16x128xf32> to vector<1xf32>
      %26 = vector.shape_cast %25 : vector<1xf32> to vector<1x1x1xf32>
      %27 = vector.extract %26[0, 0, 0] : f32 from vector<1x1x1xf32>
      %cst_21 = arith.constant 9.99999974E-6 : f32
      %28 = arith.addf %27, %cst_21 : f32
      %29 = arith.divf %22, %28 : f32
      %c0_22 = arith.constant 0 : index
      %c0_23 = arith.constant 0 : index
      %30 = memref.load %arg4[%c0_22, %c0_23] : memref<1x1xf32, #tpu.memory_space<smem>>
      memref.store %29, %arg4[%c0_22, %c0_23] : memref<1x1xf32, #tpu.memory_space<smem>>
    } else {
    }
    return
  }
  func.func @transform_0(%arg0: i32) -> (i32, i32) {
    %c0_i32 = arith.constant 0 : i32
    %c0_i32_0 = arith.constant 0 : i32
    return %arg0, %c0_i32 : i32, i32
  }
  func.func @transform_1(%arg0: i32) -> (i32, i32) {
    %c0_i32 = arith.constant 0 : i32
    %c0_i32_0 = arith.constant 0 : i32
    return %arg0, %c0_i32 : i32, i32
  }
  func.func @transform_2(%arg0: i32) -> (i32, i32) {
    %c0_i32 = arith.constant 0 : i32
    %c0_i32_0 = arith.constant 0 : i32
    return %arg0, %c0_i32 : i32, i32
  }
  func.func @transform_3(%arg0: i32) -> (i32, i32) {
    %c0_i32 = arith.constant 0 : i32
    %c0_i32_0 = arith.constant 0 : i32
    %c0_i32_1 = arith.constant 0 : i32
    return %c0_i32, %c0_i32_0 : i32, i32
  }
}

</mosaic_0001>

<llo_original>
// kernel: tpu_custom_call.1
$region0: #{tpu_custom_call.1}
  #allocation0 [shape = 'u32[]', space=smem, size = 0x4, offset = 0x4, fixed_abs, tag = 'smem constant byte address 0x4 - core index']
  #allocation1 [shape = 'u32[144,128]{1,0:T(1,128)}', space=vmem, size = 0x12000, scoped, tag = 'internal scratch']
  #allocation2 [shape = 'f32[16,128]{1,0:T(8,128)}', space=vmem, size = 0x2000, scoped, tag = 'scratch operand']
  #allocation3 [shape = 'f32[16,128]{1,0:T(8,128)}', space=vmem, size = 0x2000, scoped, tag = 'scratch operand']
  %s0 = inlined_call_operand.hbm [shape: f32[16,128], index: 0, kind: input, shape index: {}]
  %s1 = inlined_call_operand.hbm [shape: f32[16,128], index: 1, kind: input, shape index: {}]
  %s2 = inlined_call_operand.hbm [shape: f32[16,128], index: 2, kind: input, shape index: {}]
  %s3 = inlined_call_operand.hbm [shape: f32[1,1], index: 3, kind: output, shape index: {}]
  %s4 = sld [smem:[#allocation0]]
  $region42: #{tpu_custom_call.1} parent=0
    _
  %s6 = ssub.s32 1, %s4
  %s7 = scalar_select 0, %s6, %s4
  $region1: #{tpu_custom_call.1} parent=0
    #allocation4 [shape = 'u8[8192]{0}', space=vmem, size = 0x2000, scoped, tag = 'input window, operand 0, single buffered']
    #allocation5 [shape = 's32[1]{0}', space=sflag, size = 0x4, scoped, tag = 'scoped memory for tpu_custom_call.1']
    #allocation6 [shape = 's32[1]{0}', space=sflag, size = 0x4, scoped, tag = 'scoped memory for tpu_custom_call.1']
    #allocation7 [shape = 'u8[8192]{0}', space=vmem, size = 0x2000, scoped, tag = 'input window, operand 1, single buffered']
    #allocation8 [shape = 's32[1]{0}', space=sflag, size = 0x4, scoped, tag = 'scoped memory for tpu_custom_call.1']
    #allocation9 [shape = 'u8[8192]{0}', space=vmem, size = 0x2000, scoped, tag = 'input window, operand 2, single buffered']
    #allocation10 [shape = 'u8[512]{0}', space=smem, size = 0x200, scoped, tag = 'output window, operand 0, single buffered']
    %8 = vsyncpa [#allocation5], 0
    %9 = vsyncpa [#allocation8], 0
    %10 = vsyncpa [#allocation6], 0
    // Predicated region
    $region2: #{tpu_custom_call.1} parent=1 // pred_check
      _
    $region3: #{tpu_custom_call.1} parent=1 // pred_check_branch
      %12 = sbr.rel (0) target = $region5
    $region4: #{tpu_custom_call.1} parent=1 // pred_region
      %s14 = ssub.s32 256, 256
      %15 = vsyncadd [#allocation5], %s14
      %s16 = sshll.u32 [#allocation4], 4
      %s17 = int_to_ptr.vmem [resolvable:$true] %s16
      %22 = dma.hbm_to_vmem [thread:$0]  %s0, 256, %s17, [#allocation5], 128, 128, 8
    $region5: #{tpu_custom_call.1} parent=1 // pred_fallthru
      _
    // Predicated region
    $region6: #{tpu_custom_call.1} parent=1 // pred_check
      _
    $region7: #{tpu_custom_call.1} parent=1 // pred_check_branch
      %24 = sbr.rel (0) target = $region9
    $region8: #{tpu_custom_call.1} parent=1 // pred_region
      %s26 = ssub.s32 256, 256
      %27 = vsyncadd [#allocation8], %s26
      %s28 = sshll.u32 [#allocation7], 4
      %s29 = int_to_ptr.vmem [resolvable:$true] %s28
      %34 = dma.hbm_to_vmem [thread:$0]  %s1, 256, %s29, [#allocation8], 128, 128, 8
    $region9: #{tpu_custom_call.1} parent=1 // pred_fallthru
      _
    // Predicated region
    $region10: #{tpu_custom_call.1} parent=1 // pred_check
      _
    $region11: #{tpu_custom_call.1} parent=1 // pred_check_branch
      %36 = sbr.rel (0) target = $region13
    $region12: #{tpu_custom_call.1} parent=1 // pred_region
      %s38 = ssub.s32 256, 256
      %39 = vsyncadd [#allocation8], %s38
      %s40 = sshll.u32 [#allocation9], 4
      %s41 = int_to_ptr.vmem [resolvable:$true] %s40
      %46 = dma.hbm_to_vmem [thread:$0]  %s2, 256, %s41, [#allocation8], 128, 128, 8
    $region13: #{tpu_custom_call.1} parent=1 // pred_fallthru
      _
    // Predicated region
    $region14: #{tpu_custom_call.1} parent=1 // pred_check
      _
    $region15: #{tpu_custom_call.1} parent=1 // pred_check_branch
      %48 = sbr.rel (0) target = $region17
    $region16: #{tpu_custom_call.1} parent=1 // pred_region
      %49 = dma.done [#allocation5], 256
    $region17: #{tpu_custom_call.1} parent=1 // pred_fallthru
      _
    // Predicated region
    $region18: #{tpu_custom_call.1} parent=1 // pred_check
      _
    $region19: #{tpu_custom_call.1} parent=1 // pred_check_branch
      %51 = sbr.rel (0) target = $region21
    $region20: #{tpu_custom_call.1} parent=1 // pred_region
      %52 = dma.done [#allocation8], 256
    $region21: #{tpu_custom_call.1} parent=1 // pred_fallthru
      _
    // Predicated region
    $region22: #{tpu_custom_call.1} parent=1 // pred_check
      _
    $region23: #{tpu_custom_call.1} parent=1 // pred_check_branch
      %54 = sbr.rel (0) target = $region25
    $region24: #{tpu_custom_call.1} parent=1 // pred_region
      %55 = dma.done [#allocation8], 256
    $region25: #{tpu_custom_call.1} parent=1 // pred_fallthru
      _
    %p56 = scmp.eq.s32.totalorder 0, 0
    // Predicated region
    $region26: #{tpu_custom_call.1} parent=1 // pred_check
      %p57 = pneg %p56
    $region27: #{tpu_custom_call.1} parent=1 // pred_check_branch
      %59 = sbr.rel (%p57) target = $region29
    $region28: #{tpu_custom_call.1} parent=1 // pred_region
      %60 = vst [vmem:[#allocation2] sm:$0xff] 0.0
      %61 = vst [vmem:[#allocation2 + $0x8] sm:$0xff] 0.0
      %62 = vst [vmem:[#allocation3] sm:$0xff] 0.0
      %63 = vst [vmem:[#allocation3 + $0x8] sm:$0xff] 0.0
    $region29: #{tpu_custom_call.1} parent=1 // pred_fallthru
      _
    %v64 = vld [vmem:[#allocation4] sm:$0xff]
    %v65 = vld [vmem:[#allocation4 + $0x8] sm:$0xff]
    %v66 = vld [vmem:[#allocation7] sm:$0xff]
    %v67 = vld [vmem:[#allocation7 + $0x8] sm:$0xff]
    %v68 = vld [vmem:[#allocation9] sm:$0xff]
    %v69 = vld [vmem:[#allocation9 + $0x8] sm:$0xff]
    %v70 = vsub.f32 %v64, %v66
    %v71 = vsub.f32 %v65, %v67
    %v72 = vand.u32 2147483647, %v70
    %v73 = vand.u32 2147483647, %v71
    %v74 = vmul.f32 %v72, %v68
    %v75 = vmul.f32 %v73, %v69
    %v76 = vld [vmem:[#allocation2] sm:$0xff]
    %v77 = vld [vmem:[#allocation2 + $0x8] sm:$0xff]
    %v78 = vadd.f32 %v76, %v74
    %v79 = vadd.f32 %v77, %v75
    %80 = vst [vmem:[#allocation2] sm:$0xff] %v78
    %81 = vst [vmem:[#allocation2 + $0x8] sm:$0xff] %v79
    %v82 = vld [vmem:[#allocation3] sm:$0xff]
    %v83 = vld [vmem:[#allocation3 + $0x8] sm:$0xff]
    %v84 = vadd.f32 %v82, %v68
    %v85 = vadd.f32 %v83, %v69
    %86 = vst [vmem:[#allocation3] sm:$0xff] %v84
    %87 = vst [vmem:[#allocation3 + $0x8] sm:$0xff] %v85
    // Predicated region
    $region30: #{tpu_custom_call.1} parent=1 // pred_check
      %p88 = pneg %p56
    $region31: #{tpu_custom_call.1} parent=1 // pred_check_branch
      %90 = sbr.rel (%p88) target = $region33
    $region32: #{tpu_custom_call.1} parent=1 // pred_region
      %v91 = vld [vmem:[#allocation2] sm:$0xff]
      %v92 = vld [vmem:[#allocation2 + $0x8] sm:$0xff]
      %v93 = vadd.f32 %v91, %v92
      %94 = vadd.xlane.f32.xlu0 %v93
      %v95 = vpop.xlane.xlu0 %94
      %v96 = vrot.slane %v95, 4
      %v97 = vadd.f32 %v95, %v96
      %v98 = vrot.slane %v97, 2
      %v99 = vadd.f32 %v97, %v98
      %v100 = vrot.slane %v99, 1
      %v101 = vadd.f32 %v99, %v100
      %s102 = vtos %v101
      %v103 = vld [vmem:[#allocation3] sm:$0xff]
      %v104 = vld [vmem:[#allocation3 + $0x8] sm:$0xff]
      %v105 = vadd.f32 %v103, %v104
      %106 = vadd.xlane.f32.xlu0 %v105
      %v107 = vpop.xlane.xlu0 %106
      %v108 = vrot.slane %v107, 4
      %v109 = vadd.f32 %v107, %v108
      %v110 = vrot.slane %v109, 2
      %v111 = vadd.f32 %v109, %v110
      %v112 = vrot.slane %v111, 1
      %v113 = vadd.f32 %v111, %v112
      %s114 = vtos %v113
      %s115 = sadd.f32 %s114, 1e-05
      %v116 = vstv %s115
      %v117 = vrcp.pop %v116
      %s118 = vtos %v117
      %s119 = smul.f32 %s102, %s118
      %s120 = scalar_lea.smem [#allocation10], 0
      %121 = sst [smem:[%s120]] %s119
    $region33: #{tpu_custom_call.1} parent=1 // pred_fallthru
      _
    // Predicated region
    $region34: #{tpu_custom_call.1} parent=1 // pred_check
      _
    $region35: #{tpu_custom_call.1} parent=1 // pred_check_branch
      %123 = sbr.rel (0) target = $region37
    $region36: #{tpu_custom_call.1} parent=1 // pred_region
      %s125 = ssub.s32 16, 16
      %126 = vsyncadd [#allocation6], %s125
      %129 = dma.smem_to_hbm [#allocation10], 16, %s3, [#allocation6]
    $region37: #{tpu_custom_call.1} parent=1 // pred_fallthru
      _
    // Predicated region
    $region38: #{tpu_custom_call.1} parent=1 // pred_check
      _
    $region39: #{tpu_custom_call.1} parent=1 // pred_check_branch
      %131 = sbr.rel (0) target = $region41
    $region40: #{tpu_custom_call.1} parent=1 // pred_region
      %132 = dma.done [#allocation6], 16
    $region41: #{tpu_custom_call.1} parent=1 // pred_fallthru
      _
    %133 = sfence
    %134 = vsyncpa [#allocation5], 1
    %135 = vsyncpa [#allocation8], 1
    %136 = vsyncpa [#allocation6], 1

</llo_original>
